<compile_context>
chip_gen: v6e
topology: v6e:2x2x1
jax: 0.10.0
libtpu: 0.0.40
codegen_flags: <defaults>
</compile_context>

<pallas_src>
import functools

import jax
import jax.numpy as jnp
from jax.experimental import pallas as pl
from jax.experimental.pallas import tpu as pltpu

LANES = 128
SUBLANES = 8
CHUNK_ROWS = 64            # (64, 128) f32 chunk = 8 vregs per operand -> no spills
MAX_ROW_TILE = 2048        # 2048 x 128 x f32 = 1 MiB per input block
SPLIT_MIN_ROWS = 1024      # force >= 2 grid steps (v7x megacore) above this many rows


def _cdiv(a, b):
    return -(-a // b)


def _round_up(x, m):
    return _cdiv(x, m) * m


def _sublane_multiple(dtype):
    # Second-minor alignment so packed sub-32-bit rows stay tile-aligned
    # (8 for f32, 16 for bf16/f16, 32 for 8-bit types).
    return SUBLANES * max(1, 4 // jnp.dtype(dtype).itemsize)


def _lbhinge_tile_kernel(pred_ref, label_ref, out_ref, *, threshold, total_rows,
                         row_tile, chunk_rows, num_full_chunks, rem_rows, masked):
    """One (row_tile, 128) tile -> (1, 2, 8, 128) partials: [0]=SSE, [1]=#positive."""
    thr = jnp.float32(threshold)
    tile_row0 = pl.program_id(0) * row_tile          # first global row of this tile

    def chunk_terms(row_start, nrows, row_iota):
        # Native-dtype loads, f32 arithmetic (no bf16 VALU dependence on v5e).
        pred = pred_ref[pl.ds(row_start, nrows), :].astype(jnp.float32)
        label = label_ref[pl.ds(row_start, nrows), :].astype(jnp.float32)
        negative = label < thr
        # negative: target 0 and prediction hinged -> diff = relu(pred)
        # positive: diff = pred - label
        diff = jnp.where(negative, jnp.maximum(pred, 0.0), pred - label)
        sq = diff * diff
        pos = (pred > thr).astype(jnp.float32)
        if masked:
            # Only the last grid step can contain garbage rows (OOB block read).
            # A few extra VPU ops/element, well inside this HBM-bound kernel's
            # VALU slack; not emitted at all when rows % row_tile == 0.
            valid = (tile_row0 + row_start) + row_iota < total_rows
            sq = jnp.where(valid, sq, 0.0)
            pos = jnp.where(valid, pos, 0.0)
        # Pure-VPU partial reduction (nrows, 128) -> (8, 128); leading-dim split
        # reshape is layout-free.
        sse_p = jnp.sum(sq.reshape(-1, SUBLANES, LANES), axis=0)
        pos_p = jnp.sum(pos.reshape(-1, SUBLANES, LANES), axis=0)
        return sse_p, pos_p

    zeros = jnp.zeros((SUBLANES, LANES), jnp.float32)
    chunk_iota = (jax.lax.broadcasted_iota(jnp.int32, (chunk_rows, LANES), 0)
                  if masked else None)

    def body(c, carry):
        sse_acc, pos_acc = carry
        start = pl.multiple_of(c * chunk_rows, chunk_rows)
        sse_p, pos_p = chunk_terms(start, chunk_rows, chunk_iota)
        return sse_acc + sse_p, pos_acc + pos_p

    sse_acc, pos_acc = jax.lax.fori_loop(
        0, num_full_chunks, body, (zeros, zeros),
        unroll=True if num_full_chunks <= 4 else 2)

    if rem_rows:
        # Static leftover chunk inside the tile (rem_rows is a multiple of 8).
        rem_iota = (jax.lax.broadcasted_iota(jnp.int32, (rem_rows, LANES), 0)
                    if masked else None)
        sse_p, pos_p = chunk_terms(num_full_chunks * chunk_rows, rem_rows, rem_iota)
        sse_acc = sse_acc + sse_p
        pos_acc = pos_acc + pos_p

    out_ref[0, 0] = sse_acc
    out_ref[0, 1] = pos_acc


def _lbhinge_partials(pred2d, label2d, threshold, rows, max_row_tile):
    """Run the Pallas kernel over a (rows, 128) slab; return (sse, num_positive)."""
    align = max(_sublane_multiple(pred2d.dtype), _sublane_multiple(label2d.dtype))
    max_row_tile = max(align, (max_row_tile // align) * align)

    if rows > max_row_tile:
        row_tile = max_row_tile
    elif rows >= SPLIT_MIN_ROWS:
        # Split so the "parallel" grid axis has work for both v7x TensorCores.
        row_tile = min(rows, _round_up(_cdiv(rows, 2), align))
    else:
        row_tile = rows
    num_tiles = _cdiv(rows, row_tile)
    masked = (rows % row_tile) != 0            # last tile reads OOB garbage rows

    chunk_rows = min(CHUNK_ROWS, row_tile)
    num_full_chunks = row_tile // chunk_rows
    rem_rows = row_tile % chunk_rows           # multiple of 8 (or 0) by construction

    kernel = functools.partial(
        _lbhinge_tile_kernel, threshold=float(threshold), total_rows=rows,
        row_tile=row_tile, chunk_rows=chunk_rows, num_full_chunks=num_full_chunks,
        rem_rows=rem_rows, masked=masked)

    def in_index(i):
        return (i, 0)

    if num_tiles >= 3:
        try:
            # Deeper input pipelining hides DMA issue gaps between grid steps.
            in_spec = pl.BlockSpec((row_tile, LANES), in_index,
                                   pipeline_mode=pl.Buffered(3))
        except TypeError:   # older BlockSpec without pipeline_mode: default 2 buffers
            in_spec = pl.BlockSpec((row_tile, LANES), in_index)
    else:
        in_spec = pl.BlockSpec((row_tile, LANES), in_index)

    bytes_in = rows * LANES * (pred2d.dtype.itemsize + label2d.dtype.itemsize)
    bytes_out = num_tiles * 2 * SUBLANES * LANES * 4
    cost = pl.CostEstimate(flops=9 * rows * LANES, transcendentals=0,
                           bytes_accessed=bytes_in + bytes_out)

    partials = pl.pallas_call(
        kernel,
        out_shape=jax.ShapeDtypeStruct((num_tiles, 2, SUBLANES, LANES), jnp.float32),
        grid_spec=pltpu.PrefetchScalarGridSpec(
            num_scalar_prefetch=0,
            grid=(num_tiles,),
            in_specs=[in_spec, in_spec],
            out_specs=pl.BlockSpec((1, 2, SUBLANES, LANES), lambda i: (i, 0, 0, 0)),
        ),
        compiler_params=pltpu.CompilerParams(
            dimension_semantics=("parallel",),
            vmem_limit_bytes=32 * 1024 * 1024),
        cost_estimate=cost,
    )(pred2d, label2d)

    # One tiny cross-tile / cross-lane reduce; fuses into the scalar epilogue.
    return jnp.sum(partials[:, 0]), jnp.sum(partials[:, 1])


def _hinge_terms(pred, label, threshold):
    """Plain-JAX SSE / positive-count for the (< align*128 element) leftover."""
    pred = pred.astype(jnp.float32)
    label = label.astype(jnp.float32)
    negative = label < threshold
    diff = jnp.where(negative, jnp.maximum(pred, 0.0), pred - label)
    return jnp.sum(diff * diff), jnp.sum((pred > threshold).astype(jnp.float32))


def lbhinge_loss(prediction, label, target_bb=None, threshold=-100.0, clip=None, *,
                 max_row_tile=MAX_ROW_TILE):
    """JAX/Pallas equivalent of LBHinge.forward(prediction, label)."""
    del target_bb  # unused, as in the PyTorch forward
    assert prediction.shape == label.shape
    n_elem = prediction.size

    pred_flat = prediction.reshape(-1)        # free bitcast, native dtype
    label_flat = label.reshape(-1)

    # The kernel consumes full, sublane/lane-aligned (rows, 128) slabs in the
    # native dtype; whatever cannot form such rows (< align*128 elements) is
    # folded in with a tiny XLA-side correction -- no jnp.pad, no wrapper astype.
    align = max(_sublane_multiple(pred_flat.dtype), _sublane_multiple(label_flat.dtype))
    n_kernel = (n_elem // (align * LANES)) * (align * LANES)
    rows = n_kernel // LANES

    sse = jnp.zeros((), jnp.float32)
    num_positive = jnp.zeros((), jnp.float32)

    if rows > 0:
        if n_kernel == n_elem:
            pred2d = pred_flat.reshape(rows, LANES)        # pure metadata reshape
            label2d = label_flat.reshape(rows, LANES)
        else:
            # Ragged total: XLA materializes the aligned prefix once (cheaper
            # than padding both arrays; keeps the kernel lane-unmasked).
            pred2d = jax.lax.slice(pred_flat, (0,), (n_kernel,)).reshape(rows, LANES)
            label2d = jax.lax.slice(label_flat, (0,), (n_kernel,)).reshape(rows, LANES)
        sse, num_positive = _lbhinge_partials(pred2d, label2d, threshold, rows,
                                              max_row_tile)

    if n_kernel != n_elem:
        t_sse, t_pos = _hinge_terms(pred_flat[n_kernel:], label_flat[n_kernel:],
                                    threshold)
        sse = sse + t_sse
        num_positive = num_positive + t_pos

    mse = sse / jnp.float32(n_elem)                        # MSELoss(reduction='mean')
    loss = jnp.where(num_positive > 0, mse / num_positive, mse)
    if clip is not None:
        loss = jnp.minimum(loss, jnp.float32(clip))
    return loss


def _lbhinge_reference(prediction, label, threshold=-100.0, clip=None):
    """Pure-JAX reference mirroring the PyTorch forward, for validation."""
    prediction = prediction.astype(jnp.float32)
    label = label.astype(jnp.float32)
    negative_mask = (label < threshold).astype(jnp.float32)
    positive_mask = 1.0 - negative_mask
    num_positive = jnp.sum((prediction > threshold).astype(jnp.float32))
    pred = negative_mask * jax.nn.relu(prediction) + positive_mask * prediction
    mse = jnp.mean((pred - positive_mask * label) ** 2)
    loss = jnp.where(num_positive > 0, mse / num_positive, mse)
    if clip is not None:
        loss = jnp.minimum(loss, jnp.float32(clip))
    return loss


if __name__ == "__main__":
    key = jax.random.PRNGKey(0)
    k_pred, k_label, k_mask, k_pred2, k_label2, k_mask2 = jax.random.split(key, 6)
    threshold = -100.0

    # 1) NCHW score maps, aligned total size: (batch=2, channels=4, 16, 16) f32.
    shape = (2, 4, 16, 16)
    prediction = jax.random.normal(k_pred, shape, dtype=jnp.float32)
    label = jax.random.normal(k_label, shape, dtype=jnp.float32)
    label = jnp.where(jax.random.bernoulli(k_mask, p=0.25, shape=shape),
                      jnp.float32(-200.0), label)

    loss = jax.block_until_ready(lbhinge_loss(prediction, label, threshold=threshold))
    ref = jax.block_until_ready(_lbhinge_reference(prediction, label, threshold=threshold))
    assert jnp.allclose(loss, ref, rtol=1e-5, atol=1e-6), (loss, ref)

    # 2) Ragged total size (wrapper-side lane tail) + multi-tile grid exercising
    #    the in-kernel row mask and the Buffered(3) pipeline + clip path.
    shape2 = (2, 4, 20, 20)                     # 3200 elems -> 3072 kernel + 128 tail
    prediction2 = jax.random.normal(k_pred2, shape2, dtype=jnp.float32)
    label2 = jnp.where(jax.random.bernoulli(k_mask2, p=0.3, shape=shape2),
                       jnp.float32(-200.0),
                       jax.random.normal(k_label2, shape2, dtype=jnp.float32))
    ref2 = jax.block_until_ready(
        _lbhinge_reference(prediction2, label2, threshold=threshold, clip=0.05))
    loss2a = jax.block_until_ready(
        lbhinge_loss(prediction2, label2, threshold=threshold, clip=0.05,
                     max_row_tile=16))          # 2 tiles, masked last tile
    loss2b = jax.block_until_ready(
        lbhinge_loss(prediction2, label2, threshold=threshold, clip=0.05,
                     max_row_tile=8))           # 3 tiles, deeper input pipelining
    assert jnp.allclose(loss2a, ref2, rtol=1e-5, atol=1e-6), (loss2a, ref2)
    assert jnp.allclose(loss2b, ref2, rtol=1e-5, atol=1e-6), (loss2b, ref2)

    # 3) bf16 inputs: streamed in native dtype, cast per-chunk inside the kernel.
    pred_bf16 = prediction.astype(jnp.bfloat16)
    label_bf16 = label.astype(jnp.bfloat16)
    loss3 = jax.block_until_ready(
        lbhinge_loss(pred_bf16, label_bf16, threshold=threshold))
    ref3 = jax.block_until_ready(
        _lbhinge_reference(pred_bf16, label_bf16, threshold=threshold))
    assert jnp.allclose(loss3, ref3, rtol=1e-4, atol=1e-6), (loss3, ref3)

    # 4) num_positive == 0 branch.
    prediction4 = jnp.full(shape, -250.0, dtype=jnp.float32)
    loss4 = jax.block_until_ready(lbhinge_loss(prediction4, label, threshold=threshold))
    ref4 = jax.block_until_ready(_lbhinge_reference(prediction4, label, threshold=threshold))
    assert jnp.allclose(loss4, ref4, rtol=1e-5, atol=1e-6), (loss4, ref4)

    print("KERNEL_OK")
</pallas_src>

<mosaic_0001>
module attributes {stable_mosaic.version = 11 : i64} {
  func.func @_lbhinge_tile_kernel(%arg0: i32, %arg1: memref<16x128xf32, #tpu.memory_space<vmem>>, %arg2: memref<16x128xf32, #tpu.memory_space<vmem>>, %arg3: memref<1x2x8x128xf32, #tpu.memory_space<vmem>>) attributes {dimension_semantics = [#tpu.dimension_semantics<parallel>], iteration_bounds = array<i64: 1>, scalar_prefetch = 0 : i64, scratch_operands = 0 : i64, tpu.core_type = #tpu.core_type<tc>, window_params = [{transform_indices = @transform_0, window_bounds = array<i64: 16, 128>}, {transform_indices = @transform_1, window_bounds = array<i64: 16, 128>}, {transform_indices = @transform_2, window_bounds = array<i64: 1, 2, 8, 128>}]} {
    %cst = arith.constant 0.000000e+00 : f32
    %0 = vector.broadcast %cst : f32 to vector<8x128xf32>
    %cst_0 = arith.constant -1.000000e+02 : f32
    %c0_i32 = arith.constant 0 : i32
    %c16_i32 = arith.constant 16 : i32
    %1 = arith.muli %c0_i32, %c16_i32 : i32
    %2 = tpu.assume_multiple %1, 16 : i32
    %3 = arith.index_cast %2 : i32 to index
    %c0 = arith.constant 0 : index
    %4 = vector.load %arg1[%3, %c0] : memref<16x128xf32, #tpu.memory_space<vmem>>, vector<16x128xf32>
    %5 = arith.index_cast %2 : i32 to index
    %c0_1 = arith.constant 0 : index
    %6 = vector.load %arg2[%5, %c0_1] : memref<16x128xf32, #tpu.memory_space<vmem>>, vector<16x128xf32>
    %7 = vector.broadcast %cst_0 : f32 to vector<16x128xf32>
    %8 = arith.cmpf olt, %6, %7 : vector<16x128xf32>
    %cst_2 = arith.constant 0.000000e+00 : f32
    %9 = vector.broadcast %cst_2 : f32 to vector<16x128xf32>
    %10 = arith.maximumf %4, %9 : vector<16x128xf32>
    %11 = arith.subf %4, %6 : vector<16x128xf32>
    %12 = arith.select %8, %10, %11 : vector<16x128xi1>, vector<16x128xf32>
    %13 = arith.mulf %12, %12 : vector<16x128xf32>
    %14 = vector.broadcast %cst_0 : f32 to vector<16x128xf32>
    %15 = arith.cmpf ogt, %4, %14 : vector<16x128xf32>
    %16 = arith.extui %15 : vector<16x128xi1> to vector<16x128xi32>
    %17 = arith.sitofp %16 : vector<16x128xi32> to vector<16x128xf32>
    %18 = vector.shape_cast %13 : vector<16x128xf32> to vector<2x8x128xf32>
    %cst_3 = arith.constant dense<0.000000e+00> : vector<8x128xf32>
    %19 = vector.multi_reduction <add>, %18, %cst_3 [0] : vector<2x8x128xf32> to vector<8x128xf32>
    %20 = vector.shape_cast %17 : vector<16x128xf32> to vector<2x8x128xf32>
    %cst_4 = arith.constant dense<0.000000e+00> : vector<8x128xf32>
    %21 = vector.multi_reduction <add>, %20, %cst_4 [0] : vector<2x8x128xf32> to vector<8x128xf32>
    %22 = arith.addf %0, %19 : vector<8x128xf32>
    %23 = arith.addf %0, %21 : vector<8x128xf32>
    %c1_i32 = arith.constant 1 : i32
    %c0_5 = arith.constant 0 : index
    %c0_6 = arith.constant 0 : index
    %c0_7 = arith.constant 0 : index
    %c0_8 = arith.constant 0 : index
    %24 = vector.load %arg3[%c0_5, %c0_6, %c0_7, %c0_8] : memref<1x2x8x128xf32, #tpu.memory_space<vmem>>, vector<1x1x8x128xf32>
    %25 = vector.shape_cast %24 : vector<1x1x8x128xf32> to vector<8x128xf32>
    %26 = vector.shape_cast %22 : vector<8x128xf32> to vector<1x1x8x128xf32>
    tpu.vector_store %arg3[%c0_5, %c0_6, %c0_7, %c0_8], %26 {strides = array<i32>} : memref<1x2x8x128xf32, #tpu.memory_space<vmem>>, vector<1x1x8x128xf32>,
    %c0_9 = arith.constant 0 : index
    %c1 = arith.constant 1 : index
    %c0_10 = arith.constant 0 : index
    %c0_11 = arith.constant 0 : index
    %27 = vector.load %arg3[%c0_9, %c1, %c0_10, %c0_11] : memref<1x2x8x128xf32, #tpu.memory_space<vmem>>, vector<1x1x8x128xf32>
    %28 = vector.shape_cast %27 : vector<1x1x8x128xf32> to vector<8x128xf32>
    %29 = vector.shape_cast %23 : vector<8x128xf32> to vector<1x1x8x128xf32>
    tpu.vector_store %arg3[%c0_9, %c1, %c0_10, %c0_11], %29 {strides = array<i32>} : memref<1x2x8x128xf32, #tpu.memory_space<vmem>>, vector<1x1x8x128xf32>,
    return
  }
  func.func @transform_0(%arg0: i32) -> (i32, i32) {
    %c0_i32 = arith.constant 0 : i32
    %c0_i32_0 = arith.constant 0 : i32
    return %arg0, %c0_i32 : i32, i32
  }
  func.func @transform_1(%arg0: i32) -> (i32, i32) {
    %c0_i32 = arith.constant 0 : i32
    %c0_i32_0 = arith.constant 0 : i32
    return %arg0, %c0_i32 : i32, i32
  }
  func.func @transform_2(%arg0: i32) -> (i32, i32, i32, i32) {
    %c0_i32 = arith.constant 0 : i32
    %c0_i32_0 = arith.constant 0 : i32
    %c0_i32_1 = arith.constant 0 : i32
    %c0_i32_2 = arith.constant 0 : i32
    return %arg0, %c0_i32, %c0_i32_0, %c0_i32_1 : i32, i32, i32, i32
  }
}

</mosaic_0001>

<llo_original>
// kernel: tpu_custom_call.1
$region0: #{tpu_custom_call.1}
  #allocation0 [shape = 'u32[]', space=smem, size = 0x4, offset = 0x4, fixed_abs, tag = 'smem constant byte address 0x4 - core index']
  #allocation1 [shape = 'u32[144,128]{1,0:T(1,128)}', space=vmem, size = 0x12000, scoped, tag = 'internal scratch']
  %s0 = inlined_call_operand.hbm [shape: f32[16,128], index: 0, kind: input, shape index: {}]
  %s1 = inlined_call_operand.hbm [shape: f32[16,128], index: 1, kind: input, shape index: {}]
  %s2 = inlined_call_operand.hbm [shape: f32[1,2,8,128], index: 2, kind: output, shape index: {}]
  %s3 = sld [smem:[#allocation0]]
  $region26: #{tpu_custom_call.1} parent=0
    _
  %s5 = ssub.s32 1, %s3
  %s6 = scalar_select 0, %s5, %s3
  $region1: #{tpu_custom_call.1} parent=0
    #allocation2 [shape = 'u8[8192]{0}', space=vmem, size = 0x2000, scoped, tag = 'input window, operand 0, single buffered']
    #allocation3 [shape = 's32[1]{0}', space=sflag, size = 0x4, scoped, tag = 'scoped memory for tpu_custom_call.1']
    #allocation4 [shape = 's32[1]{0}', space=sflag, size = 0x4, scoped, tag = 'scoped memory for tpu_custom_call.1']
    #allocation5 [shape = 'u8[8192]{0}', space=vmem, size = 0x2000, scoped, tag = 'input window, operand 1, single buffered']
    #allocation6 [shape = 's32[1]{0}', space=sflag, size = 0x4, scoped, tag = 'scoped memory for tpu_custom_call.1']
    #allocation7 [shape = 'u8[8192]{0}', space=vmem, size = 0x2000, scoped, tag = 'output window, operand 0, single buffered']
    %7 = vsyncpa [#allocation3], 0
    %8 = vsyncpa [#allocation6], 0
    %9 = vsyncpa [#allocation4], 0
    // Predicated region
    $region2: #{tpu_custom_call.1} parent=1 // pred_check
      _
    $region3: #{tpu_custom_call.1} parent=1 // pred_check_branch
      %11 = sbr.rel (0) target = $region5
    $region4: #{tpu_custom_call.1} parent=1 // pred_region
      %s13 = ssub.s32 256, 256
      %14 = vsyncadd [#allocation3], %s13
      %s15 = sshll.u32 [#allocation2], 4
      %s16 = int_to_ptr.vmem [resolvable:$true] %s15
      %21 = dma.hbm_to_vmem [thread:$0]  %s0, 256, %s16, [#allocation3], 128, 128, 8
    $region5: #{tpu_custom_call.1} parent=1 // pred_fallthru
      _
    // Predicated region
    $region6: #{tpu_custom_call.1} parent=1 // pred_check
      _
    $region7: #{tpu_custom_call.1} parent=1 // pred_check_branch
      %23 = sbr.rel (0) target = $region9
    $region8: #{tpu_custom_call.1} parent=1 // pred_region
      %s25 = ssub.s32 256, 256
      %26 = vsyncadd [#allocation6], %s25
      %s27 = sshll.u32 [#allocation5], 4
      %s28 = int_to_ptr.vmem [resolvable:$true] %s27
      %33 = dma.hbm_to_vmem [thread:$0]  %s1, 256, %s28, [#allocation6], 128, 128, 8
    $region9: #{tpu_custom_call.1} parent=1 // pred_fallthru
      _
    // Predicated region
    $region10: #{tpu_custom_call.1} parent=1 // pred_check
      _
    $region11: #{tpu_custom_call.1} parent=1 // pred_check_branch
      %35 = sbr.rel (0) target = $region13
    $region12: #{tpu_custom_call.1} parent=1 // pred_region
      %36 = dma.done [#allocation3], 256
    $region13: #{tpu_custom_call.1} parent=1 // pred_fallthru
      _
    // Predicated region
    $region14: #{tpu_custom_call.1} parent=1 // pred_check
      _
    $region15: #{tpu_custom_call.1} parent=1 // pred_check_branch
      %38 = sbr.rel (0) target = $region17
    $region16: #{tpu_custom_call.1} parent=1 // pred_region
      %39 = dma.done [#allocation6], 256
    $region17: #{tpu_custom_call.1} parent=1 // pred_fallthru
      _
    %v40 = vld [vmem:[#allocation2] sm:$0xff]
    %v41 = vld [vmem:[#allocation2 + $0x8] sm:$0xff]
    %v42 = vld [vmem:[#allocation5] sm:$0xff]
    %v43 = vld [vmem:[#allocation5 + $0x8] sm:$0xff]
    %vm44 = vcmp.lt.f32.partialorder %v42, -100.0
    %vm45 = vcmp.lt.f32.partialorder %v43, -100.0
    %v46 = vmax.f32 %v40, 0.0
    %v47 = vmax.f32 %v41, 0.0
    %v48 = vsub.f32 %v40, %v42
    %v49 = vsub.f32 %v41, %v43
    %v50 = vsel %vm44, %v46, %v48
    %v51 = vsel %vm45, %v47, %v49
    %v52 = vmul.f32 %v50, %v50
    %v53 = vmul.f32 %v51, %v51
    %vm54 = vcmp.gt.f32.partialorder %v40, -100.0
    %vm55 = vcmp.gt.f32.partialorder %v41, -100.0
    %v56 = vsel %vm54, 1, 0
    %v57 = vsel %vm55, 1, 0
    %v58 = vcvt.s32.f32 %v56
    %v59 = vcvt.s32.f32 %v57
    %v60 = vadd.f32 %v52, %v53
    %v61 = vadd.f32 %v58, %v59
    %v62 = vadd.f32 %v60, 0.0
    %v63 = vadd.f32 %v61, 0.0
    %64 = vst [vmem:[#allocation7] sm:$0xff] %v62
    %s65 = scalar_lea.vmem [#allocation7], 8
    %66 = vst [vmem:[%s65] sm:$0xff] %v63
    // Predicated region
    $region18: #{tpu_custom_call.1} parent=1 // pred_check
      _
    $region19: #{tpu_custom_call.1} parent=1 // pred_check_branch
      %68 = sbr.rel (0) target = $region21
    $region20: #{tpu_custom_call.1} parent=1 // pred_region
      %s70 = ssub.s32 256, 256
      %71 = vsyncadd [#allocation4], %s70
      %s72 = sshll.u32 [#allocation7], 4
      %s73 = int_to_ptr.vmem [resolvable:$true] %s72
      %78 = dma.vmem_to_hbm [thread:$0]  %s73, 256, %s2, [#allocation4], 128, 128, 8
    $region21: #{tpu_custom_call.1} parent=1 // pred_fallthru
      _
    // Predicated region
    $region22: #{tpu_custom_call.1} parent=1 // pred_check
      _
    $region23: #{tpu_custom_call.1} parent=1 // pred_check_branch
      %80 = sbr.rel (0) target = $region25
    $region24: #{tpu_custom_call.1} parent=1 // pred_region
      %81 = dma.done [#allocation4], 256
    $region25: #{tpu_custom_call.1} parent=1 // pred_fallthru
      _
    %82 = vsyncpa [#allocation3], 1
    %83 = vsyncpa [#allocation6], 1
    %84 = vsyncpa [#allocation4], 1

</llo_original>
